<compile_context>
chip_gen: v5e
topology: v5e:2x2
jax: 0.10.0
libtpu: 0.0.40
codegen_flags: <defaults>
</compile_context>

<pallas_src>
import functools

import jax
import jax.numpy as jnp
from jax.experimental import pallas as pl
from jax.experimental.pallas import tpu as pltpu

BN_EPS = 1e-5
LANE = 128
MXU_STATS_MIN_ROWS = 32   # below this a VPU column-sum is trivially cheap


def _round_up(x, m):
    return ((x + m - 1) // m) * m


def _tnet_kernel(x_ref, *refs, batch, num_points, n_enc, n_lin, mxu_stats):
    """refs = [W_enc..., W_lin..., W_fc, vecs, out_ref]

    vecs rows (each zero-padded to the packed lane width):
      rows 2*l, 2*l+1 -> gamma, beta of BN layer l (encoder layers first)
      row  2*n_bn     -> fc_out bias      (zero beyond out_dim)
      row  2*n_bn + 1 -> flattened identity matrix (zero beyond out_dim)
    """
    n_bn = n_enc + n_lin
    n_w = n_bn + 1
    w_refs = refs[:n_w]
    vecs_ref = refs[n_w]
    out_ref = refs[n_w + 1]

    V = vecs_ref[...]                               # (2*n_bn + 2, vec_width) f32

    def mm(h_bf16, w_ref):
        # bf16 MXU matmul with f32 accumulation (LHS is already bf16).
        return jnp.dot(h_bf16, w_ref[...], preferred_element_type=jnp.float32)

    def col_sums(h, ones_row):
        # Column sums over the rows of the f32 pre-activation slab.
        # MXU path: ones(1,M) @ h frees the VALU slot (f32 accumulation also
        # mitigates precision loss for large B*N).  VPU path for tiny M.
        if mxu_stats and h.shape[0] >= MXU_STATS_MIN_ROWS:
            s = jnp.dot(ones_row, h, preferred_element_type=jnp.float32)
            s2 = jnp.dot(ones_row, h * h, preferred_element_type=jnp.float32)
        else:
            s = jnp.sum(h, axis=0, keepdims=True)
            s2 = jnp.sum(h * h, axis=0, keepdims=True)
        return s, s2

    def bn_relu(h, layer, ones_row):
        # Training-mode BatchNorm1d: one-pass batch stats, folded scale/shift.
        # (The conv/linear bias preceding BN cancels exactly and is omitted.)
        inv_n = 1.0 / h.shape[0]
        s, s2 = col_sums(h, ones_row)
        mean = s * inv_n
        var = jnp.maximum(s2 * inv_n - mean * mean, 0.0)   # clamp: one-pass var
        c_pad = h.shape[1]
        gamma = V[2 * layer:2 * layer + 1, :c_pad]
        beta = V[2 * layer + 1:2 * layer + 2, :c_pad]
        a = gamma * jax.lax.rsqrt(var + BN_EPS)            # per-channel scale (EUP)
        c = beta - mean * a                                # per-channel shift
        # Emit bf16 directly: rounding commutes with ReLU/max, halves VMEM/vst
        # traffic for every live intermediate.  Padded channels stay exactly 0
        # (gamma=beta=0 there).
        return jnp.maximum(h * a + c, 0.0).astype(jnp.bfloat16)

    h = x_ref[...]                                  # (B*N, C_in) bf16

    # ---- encoder: Conv1d(k=1) == per-point matmul, + BN + ReLU --------------
    ones_pts = jnp.ones((1, batch * num_points), jnp.float32)   # hoisted
    for i in range(n_enc):
        h = bn_relu(mm(h, w_refs[i]), i, ones_pts)

    # ---- MaxPool1d(num_points): max over the points of each batch element ---
    # Free view when num_points % 16 == 0 (bf16 sublane packing).
    h = jnp.max(h.reshape(batch, num_points, h.shape[1]), axis=1)   # (B, C_pad) bf16

    # ---- linear blocks: Linear + BN + ReLU -----------------------------------
    ones_b = jnp.ones((1, batch), jnp.float32)
    for i in range(n_lin):
        h = bn_relu(mm(h, w_refs[n_enc + i]), n_enc + i, ones_b)

    # ---- fc_out + flattened identity (lane-dense, 128-padded output) ---------
    out = mm(h, w_refs[n_w - 1])                    # (B, out_pad) f32
    op = out.shape[1]
    fc_b = V[2 * n_bn:2 * n_bn + 1, :op]
    ident = V[2 * n_bn + 1:2 * n_bn + 2, :op]
    out_ref[...] = out + fc_b + ident


def tnet_forward(x, params, *, num_points, input_dim, mxu_stats=True):
    """x: (B, C_in, N) float32, NCW like the PyTorch module."""
    enc, lin, (wf, bf) = params
    B, C, N = x.shape
    assert N == num_points and C == input_dim
    out_dim = input_dim * input_dim
    out_pad = _round_up(out_dim, LANE)

    # glue: NCW -> (B*N, C) slab (channels on lanes), pre-cast to bf16 so the
    # only large HBM->VMEM DMA is half-width and in-VMEM tile padding halves.
    x2d = jnp.transpose(x, (0, 2, 1)).reshape(B * N, C).astype(jnp.bfloat16)

    # Pad every layer's OUTPUT width up to a lane-full multiple of 128.
    enc_pad = [_round_up(w.shape[0], LANE) for (w, _, _, _) in enc]
    lin_pad = [_round_up(w.shape[0], LANE) for (w, _, _, _) in lin]
    n_bn = len(enc) + len(lin)
    vec_width = max(enc_pad + lin_pad + [out_pad])

    def pad_w(w_t, in_pad, o_pad):                  # (in, out) zero-padded, bf16
        wp = jnp.zeros((in_pad, o_pad), jnp.float32)
        wp = wp.at[:w_t.shape[0], :w_t.shape[1]].set(w_t)
        return wp.astype(jnp.bfloat16)

    def pad_vec(v):                                 # (1, vec_width) f32
        return jnp.zeros((1, vec_width), jnp.float32).at[0, :v.shape[0]].set(v)

    weights, vec_rows = [], []
    in_pad = input_dim                              # first contraction unpadded
    for (w, _b, g, be), cp in zip(enc, enc_pad):
        weights.append(pad_w(w.T, in_pad, cp))
        vec_rows += [pad_vec(g), pad_vec(be)]
        in_pad = cp
    for (w, _b, g, be), cp in zip(lin, lin_pad):
        weights.append(pad_w(w.T, in_pad, cp))
        vec_rows += [pad_vec(g), pad_vec(be)]
        in_pad = cp
    weights.append(pad_w(wf.T, in_pad, out_pad))    # lane-full fc_out
    ident = jnp.eye(input_dim, dtype=jnp.float32).reshape(-1)
    vec_rows += [pad_vec(bf), pad_vec(ident)]
    vecs = jnp.concatenate(vec_rows, axis=0)        # (2*n_bn + 2, vec_width)

    flat_inputs = [x2d] + weights + [vecs]

    # ---- VMEM limit from the actual tile-padded footprint --------------------
    def padded_bytes(a):
        r, c = a.shape
        if a.dtype == jnp.bfloat16:
            return _round_up(r, 16) * _round_up(c, LANE) * 2
        return _round_up(r, 8) * _round_up(c, LANE) * 4

    max_cpad = max(enc_pad + lin_pad + [out_pad])
    live_f32 = _round_up(B * N, 8) * max_cpad * 4   # largest f32 pre-activation
    needed = (sum(padded_bytes(a) for a in flat_inputs)
              + _round_up(B, 8) * out_pad * 4
              + 4 * live_f32)                        # compiler-managed temps
    try:
        phys_vmem = pltpu.get_tpu_info().vmem_capacity_bytes
    except Exception:  # very defensive; default to the smallest generation
        phys_vmem = 64 * 1024 * 1024
    vmem_limit = int(min(phys_vmem * 3 // 4,
                         max(2 * needed, 16 * 1024 * 1024)))

    # ---- advisory cost estimate ----------------------------------------------
    mm_dims, in_d = [], input_dim
    for cp in enc_pad:
        mm_dims.append((B * N, in_d, cp)); in_d = cp
    for cp in lin_pad:
        mm_dims.append((B, in_d, cp)); in_d = cp
    mm_dims.append((B, in_d, out_pad))
    flops = 2 * sum(mi * ki * ni for mi, ki, ni in mm_dims)
    if mxu_stats:
        flops += 2 * sum(2 * mi * ni for mi, _k, ni in mm_dims[:-1])  # s & s2
    bytes_accessed = int(x2d.size * 2 + sum(w.size * 2 for w in weights)
                         + vecs.size * 4 + B * out_pad * 4)
    cost = pl.CostEstimate(flops=flops, transcendentals=n_bn * vec_width,
                           bytes_accessed=bytes_accessed)

    kernel = functools.partial(_tnet_kernel, batch=B, num_points=N,
                               n_enc=len(enc), n_lin=len(lin),
                               mxu_stats=mxu_stats)

    out_flat = pl.pallas_call(
        kernel,
        out_shape=jax.ShapeDtypeStruct((B, out_pad), jnp.float32),
        in_specs=[pl.BlockSpec(memory_space=pltpu.MemorySpace.VMEM)] * len(flat_inputs),
        out_specs=pl.BlockSpec(memory_space=pltpu.MemorySpace.VMEM),
        compiler_params=pltpu.CompilerParams(vmem_limit_bytes=vmem_limit),
        cost_estimate=cost,
    )(*flat_inputs)
    return out_flat[:, :out_dim].reshape(B, input_dim, input_dim)


def tnet_ref(x, params, *, input_dim, matmul_dtype=jnp.bfloat16):
    """Pure-JAX reference mirroring the PyTorch forward.  Matmul operands are
    cast to `matmul_dtype` (with f32 accumulation) to mirror the kernel's MXU
    precision; BN stats/ReLU/bias stay f32 exactly like the PyTorch math."""
    enc, lin, (wf, bf) = params
    B, C, N = x.shape
    h = jnp.transpose(x, (0, 2, 1)).reshape(B * N, C)

    def mm(h, w):
        return jnp.dot(h.astype(matmul_dtype), w.T.astype(matmul_dtype),
                       preferred_element_type=jnp.float32)

    def bn_relu(h, g, be):
        mean = h.mean(axis=0, keepdims=True)
        var = ((h - mean) ** 2).mean(axis=0, keepdims=True)
        return jnp.maximum((h - mean) / jnp.sqrt(var + BN_EPS) * g + be, 0.0)

    for (w, b, g, be) in enc:
        h = bn_relu(mm(h, w) + b, g, be)
    h = h.reshape(B, N, -1).max(axis=1)
    for (w, b, g, be) in lin:
        h = bn_relu(mm(h, w) + b, g, be)
    out = mm(h, wf) + bf + jnp.eye(input_dim, dtype=jnp.float32).reshape(-1)
    return out.reshape(B, input_dim, input_dim)


def init_params(key, encoder_dims, linear_dims, input_dim):
    """Deterministic synthetic parameters (PyTorch shapes, weight=(out,in))."""
    def block(key, d_in, d_out):
        k1, k2, k3, k4 = jax.random.split(key, 4)
        w = 0.1 * jax.random.normal(k1, (d_out, d_in), jnp.float32)
        b = 0.1 * jax.random.normal(k2, (d_out,), jnp.float32)
        g = 1.0 + 0.1 * jax.random.normal(k3, (d_out,), jnp.float32)
        be = 0.1 * jax.random.normal(k4, (d_out,), jnp.float32)
        return (w, b, g, be)

    keys = jax.random.split(key, len(encoder_dims) + len(linear_dims) + 1)
    ki = 0
    enc = []
    for d_in, d_out in zip(encoder_dims, encoder_dims[1:]):
        enc.append(block(keys[ki], d_in, d_out)); ki += 1
    lin = []
    for d_in, d_out in zip(linear_dims, linear_dims[1:]):
        lin.append(block(keys[ki], d_in, d_out)); ki += 1
    kf1, kf2 = jax.random.split(keys[ki])
    wf = 0.1 * jax.random.normal(kf1, (input_dim * input_dim, linear_dims[-1]),
                                 jnp.float32)
    bf = 0.1 * jax.random.normal(kf2, (input_dim * input_dim,), jnp.float32)
    return enc, lin, (wf, bf)


if __name__ == "__main__":
    # Small config consistent with Tnet(config, tnet_type='input'):
    #   num_points=16, input_dim=encoder_post_inp_dims[0]=4,
    #   encoder_dims=[4, 32, 64], linear_dims=[64, 32], fc_out: 32 -> 16.
    num_points = 16
    input_dim = 4
    encoder_dims = [input_dim, 32, 64]
    linear_dims = [64, 32]
    B = 2

    key = jax.random.PRNGKey(0)
    kp, kx = jax.random.split(key)
    params = init_params(kp, encoder_dims, linear_dims, input_dim)
    x = jax.random.normal(kx, (B, input_dim, num_points), jnp.float32)

    out = tnet_forward(x, params, num_points=num_points, input_dim=input_dim)
    out = jax.block_until_ready(out)

    ref = tnet_ref(x, params, input_dim=input_dim)
    assert out.shape == (B, input_dim, input_dim)
    if not jnp.allclose(out, ref, atol=2e-2, rtol=2e-2):
        raise AssertionError("Pallas Tnet output does not match reference")
    print("KERNEL_OK")
</pallas_src>

<mosaic_0001>
module attributes {stable_mosaic.version = 11 : i64} {
  func.func @_tnet_kernel(%arg0: memref<32x4xbf16, #tpu.memory_space<vmem>>, %arg1: memref<4x128xbf16, #tpu.memory_space<vmem>>, %arg2: memref<128x128xbf16, #tpu.memory_space<vmem>>, %arg3: memref<128x128xbf16, #tpu.memory_space<vmem>>, %arg4: memref<128x128xbf16, #tpu.memory_space<vmem>>, %arg5: memref<8x128xf32, #tpu.memory_space<vmem>>, %arg6: memref<2x128xf32, #tpu.memory_space<vmem>>) attributes {dimension_semantics = [], scalar_prefetch = 0 : i64, scratch_operands = 0 : i64, tpu.core_type = #tpu.core_type<tc>} {
    %c0 = arith.constant 0 : index
    %c0_0 = arith.constant 0 : index
    %0 = vector.load %arg5[%c0, %c0_0] : memref<8x128xf32, #tpu.memory_space<vmem>>, vector<8x128xf32>
    %c0_1 = arith.constant 0 : index
    %c0_2 = arith.constant 0 : index
    %1 = vector.load %arg0[%c0_1, %c0_2] : memref<32x4xbf16, #tpu.memory_space<vmem>>, vector<32x4xbf16>
    %cst = arith.constant 1.000000e+00 : f32
    %2 = vector.broadcast %cst : f32 to vector<1x32xf32>
    %c0_3 = arith.constant 0 : index
    %c0_4 = arith.constant 0 : index
    %3 = vector.load %arg1[%c0_3, %c0_4] : memref<4x128xbf16, #tpu.memory_space<vmem>>, vector<4x128xbf16>
    %cst_5 = arith.constant dense<0.000000e+00> : vector<32x128xf32>
    %4 = tpu.matmul %1, %3, %cst_5 {dimension_numbers = #tpu.dot_dimension_numbers<[1], [0], [0], [1], [0, 0, 1, 1], [], []>} : vector<32x4xbf16>, vector<4x128xbf16>, vector<32x128xf32> -> vector<32x128xf32>
    %cst_6 = arith.constant dense<0.000000e+00> : vector<1x128xf32>
    %5 = tpu.matmul %2, %4, %cst_6 {dimension_numbers = #tpu.dot_dimension_numbers<[1], [0], [0], [1], [0, 0, 1, 1], [], []>} : vector<1x32xf32>, vector<32x128xf32>, vector<1x128xf32> -> vector<1x128xf32>
    %6 = arith.mulf %4, %4 : vector<32x128xf32>
    %cst_7 = arith.constant dense<0.000000e+00> : vector<1x128xf32>
    %7 = tpu.matmul %2, %6, %cst_7 {dimension_numbers = #tpu.dot_dimension_numbers<[1], [0], [0], [1], [0, 0, 1, 1], [], []>} : vector<1x32xf32>, vector<32x128xf32>, vector<1x128xf32> -> vector<1x128xf32>
    %cst_8 = arith.constant 3.125000e-02 : f32
    %8 = vector.broadcast %cst_8 : f32 to vector<1x128xf32>
    %9 = arith.mulf %5, %8 : vector<1x128xf32>
    %cst_9 = arith.constant 3.125000e-02 : f32
    %10 = vector.broadcast %cst_9 : f32 to vector<1x128xf32>
    %11 = arith.mulf %7, %10 : vector<1x128xf32>
    %12 = arith.mulf %9, %9 : vector<1x128xf32>
    %13 = arith.subf %11, %12 : vector<1x128xf32>
    %cst_10 = arith.constant 0.000000e+00 : f32
    %14 = vector.broadcast %cst_10 : f32 to vector<1x128xf32>
    %15 = arith.maximumf %13, %14 : vector<1x128xf32>
    %16 = vector.extract_strided_slice %0 {offsets = [0, 0], sizes = [1, 128], strides = [1, 1]} : vector<8x128xf32> to vector<1x128xf32>
    %17 = vector.extract_strided_slice %0 {offsets = [1, 0], sizes = [1, 128], strides = [1, 1]} : vector<8x128xf32> to vector<1x128xf32>
    %cst_11 = arith.constant 9.99999974E-6 : f32
    %18 = vector.broadcast %cst_11 : f32 to vector<1x128xf32>
    %19 = arith.addf %15, %18 : vector<1x128xf32>
    %20 = math.rsqrt %19 : vector<1x128xf32>
    %21 = arith.mulf %16, %20 : vector<1x128xf32>
    %22 = arith.mulf %9, %21 : vector<1x128xf32>
    %23 = arith.subf %17, %22 : vector<1x128xf32>
    %24 = vector.broadcast %21 : vector<1x128xf32> to vector<32x128xf32>
    %25 = arith.mulf %4, %24 : vector<32x128xf32>
    %26 = vector.broadcast %23 : vector<1x128xf32> to vector<32x128xf32>
    %27 = arith.addf %25, %26 : vector<32x128xf32>
    %cst_12 = arith.constant 0.000000e+00 : f32
    %28 = vector.broadcast %cst_12 : f32 to vector<32x128xf32>
    %29 = arith.maximumf %27, %28 : vector<32x128xf32>
    %30 = arith.truncf %29 : vector<32x128xf32> to vector<32x128xbf16>
    %c0_13 = arith.constant 0 : index
    %c0_14 = arith.constant 0 : index
    %31 = vector.load %arg2[%c0_13, %c0_14] : memref<128x128xbf16, #tpu.memory_space<vmem>>, vector<128x128xbf16>
    %cst_15 = arith.constant dense<0.000000e+00> : vector<32x128xf32>
    %32 = tpu.matmul %30, %31, %cst_15 {dimension_numbers = #tpu.dot_dimension_numbers<[1], [0], [0], [1], [0, 0, 1, 1], [], []>} : vector<32x128xbf16>, vector<128x128xbf16>, vector<32x128xf32> -> vector<32x128xf32>
    %cst_16 = arith.constant dense<0.000000e+00> : vector<1x128xf32>
    %33 = tpu.matmul %2, %32, %cst_16 {dimension_numbers = #tpu.dot_dimension_numbers<[1], [0], [0], [1], [0, 0, 1, 1], [], []>} : vector<1x32xf32>, vector<32x128xf32>, vector<1x128xf32> -> vector<1x128xf32>
    %34 = arith.mulf %32, %32 : vector<32x128xf32>
    %cst_17 = arith.constant dense<0.000000e+00> : vector<1x128xf32>
    %35 = tpu.matmul %2, %34, %cst_17 {dimension_numbers = #tpu.dot_dimension_numbers<[1], [0], [0], [1], [0, 0, 1, 1], [], []>} : vector<1x32xf32>, vector<32x128xf32>, vector<1x128xf32> -> vector<1x128xf32>
    %cst_18 = arith.constant 3.125000e-02 : f32
    %36 = vector.broadcast %cst_18 : f32 to vector<1x128xf32>
    %37 = arith.mulf %33, %36 : vector<1x128xf32>
    %cst_19 = arith.constant 3.125000e-02 : f32
    %38 = vector.broadcast %cst_19 : f32 to vector<1x128xf32>
    %39 = arith.mulf %35, %38 : vector<1x128xf32>
    %40 = arith.mulf %37, %37 : vector<1x128xf32>
    %41 = arith.subf %39, %40 : vector<1x128xf32>
    %cst_20 = arith.constant 0.000000e+00 : f32
    %42 = vector.broadcast %cst_20 : f32 to vector<1x128xf32>
    %43 = arith.maximumf %41, %42 : vector<1x128xf32>
    %44 = vector.extract_strided_slice %0 {offsets = [2, 0], sizes = [1, 128], strides = [1, 1]} : vector<8x128xf32> to vector<1x128xf32>
    %45 = vector.extract_strided_slice %0 {offsets = [3, 0], sizes = [1, 128], strides = [1, 1]} : vector<8x128xf32> to vector<1x128xf32>
    %cst_21 = arith.constant 9.99999974E-6 : f32
    %46 = vector.broadcast %cst_21 : f32 to vector<1x128xf32>
    %47 = arith.addf %43, %46 : vector<1x128xf32>
    %48 = math.rsqrt %47 : vector<1x128xf32>
    %49 = arith.mulf %44, %48 : vector<1x128xf32>
    %50 = arith.mulf %37, %49 : vector<1x128xf32>
    %51 = arith.subf %45, %50 : vector<1x128xf32>
    %52 = vector.broadcast %49 : vector<1x128xf32> to vector<32x128xf32>
    %53 = arith.mulf %32, %52 : vector<32x128xf32>
    %54 = vector.broadcast %51 : vector<1x128xf32> to vector<32x128xf32>
    %55 = arith.addf %53, %54 : vector<32x128xf32>
    %cst_22 = arith.constant 0.000000e+00 : f32
    %56 = vector.broadcast %cst_22 : f32 to vector<32x128xf32>
    %57 = arith.maximumf %55, %56 : vector<32x128xf32>
    %58 = arith.truncf %57 : vector<32x128xf32> to vector<32x128xbf16>
    %59 = vector.shape_cast %58 : vector<32x128xbf16> to vector<2x16x128xbf16>
    %cst_23 = arith.constant dense<0xFF80> : vector<2x128xbf16>
    %60 = vector.multi_reduction <maximumf>, %59, %cst_23 [1] : vector<2x16x128xbf16> to vector<2x128xbf16>
    %c0_24 = arith.constant 0 : index
    %c0_25 = arith.constant 0 : index
    %61 = vector.load %arg3[%c0_24, %c0_25] : memref<128x128xbf16, #tpu.memory_space<vmem>>, vector<128x128xbf16>
    %cst_26 = arith.constant dense<0.000000e+00> : vector<2x128xf32>
    %62 = tpu.matmul %60, %61, %cst_26 {dimension_numbers = #tpu.dot_dimension_numbers<[1], [0], [0], [1], [0, 0, 1, 1], [], []>} : vector<2x128xbf16>, vector<128x128xbf16>, vector<2x128xf32> -> vector<2x128xf32>
    %cst_27 = arith.constant dense<0.000000e+00> : vector<128xf32>
    %63 = vector.multi_reduction <add>, %62, %cst_27 [0] : vector<2x128xf32> to vector<128xf32>
    %64 = vector.shape_cast %63 : vector<128xf32> to vector<1x128xf32>
    %65 = arith.mulf %62, %62 : vector<2x128xf32>
    %cst_28 = arith.constant dense<0.000000e+00> : vector<128xf32>
    %66 = vector.multi_reduction <add>, %65, %cst_28 [0] : vector<2x128xf32> to vector<128xf32>
    %67 = vector.shape_cast %66 : vector<128xf32> to vector<1x128xf32>
    %cst_29 = arith.constant 5.000000e-01 : f32
    %68 = vector.broadcast %cst_29 : f32 to vector<1x128xf32>
    %69 = arith.mulf %64, %68 : vector<1x128xf32>
    %cst_30 = arith.constant 5.000000e-01 : f32
    %70 = vector.broadcast %cst_30 : f32 to vector<1x128xf32>
    %71 = arith.mulf %67, %70 : vector<1x128xf32>
    %72 = arith.mulf %69, %69 : vector<1x128xf32>
    %73 = arith.subf %71, %72 : vector<1x128xf32>
    %cst_31 = arith.constant 0.000000e+00 : f32
    %74 = vector.broadcast %cst_31 : f32 to vector<1x128xf32>
    %75 = arith.maximumf %73, %74 : vector<1x128xf32>
    %76 = vector.extract_strided_slice %0 {offsets = [4, 0], sizes = [1, 128], strides = [1, 1]} : vector<8x128xf32> to vector<1x128xf32>
    %77 = vector.extract_strided_slice %0 {offsets = [5, 0], sizes = [1, 128], strides = [1, 1]} : vector<8x128xf32> to vector<1x128xf32>
    %cst_32 = arith.constant 9.99999974E-6 : f32
    %78 = vector.broadcast %cst_32 : f32 to vector<1x128xf32>
    %79 = arith.addf %75, %78 : vector<1x128xf32>
    %80 = math.rsqrt %79 : vector<1x128xf32>
    %81 = arith.mulf %76, %80 : vector<1x128xf32>
    %82 = arith.mulf %69, %81 : vector<1x128xf32>
    %83 = arith.subf %77, %82 : vector<1x128xf32>
    %84 = vector.broadcast %81 : vector<1x128xf32> to vector<2x128xf32>
    %85 = arith.mulf %62, %84 : vector<2x128xf32>
    %86 = vector.broadcast %83 : vector<1x128xf32> to vector<2x128xf32>
    %87 = arith.addf %85, %86 : vector<2x128xf32>
    %cst_33 = arith.constant 0.000000e+00 : f32
    %88 = vector.broadcast %cst_33 : f32 to vector<2x128xf32>
    %89 = arith.maximumf %87, %88 : vector<2x128xf32>
    %90 = arith.truncf %89 : vector<2x128xf32> to vector<2x128xbf16>
    %c0_34 = arith.constant 0 : index
    %c0_35 = arith.constant 0 : index
    %91 = vector.load %arg4[%c0_34, %c0_35] : memref<128x128xbf16, #tpu.memory_space<vmem>>, vector<128x128xbf16>
    %cst_36 = arith.constant dense<0.000000e+00> : vector<2x128xf32>
    %92 = tpu.matmul %90, %91, %cst_36 {dimension_numbers = #tpu.dot_dimension_numbers<[1], [0], [0], [1], [0, 0, 1, 1], [], []>} : vector<2x128xbf16>, vector<128x128xbf16>, vector<2x128xf32> -> vector<2x128xf32>
    %93 = vector.extract_strided_slice %0 {offsets = [6, 0], sizes = [1, 128], strides = [1, 1]} : vector<8x128xf32> to vector<1x128xf32>
    %94 = vector.extract_strided_slice %0 {offsets = [7, 0], sizes = [1, 128], strides = [1, 1]} : vector<8x128xf32> to vector<1x128xf32>
    %95 = vector.broadcast %93 : vector<1x128xf32> to vector<2x128xf32>
    %96 = arith.addf %92, %95 : vector<2x128xf32>
    %97 = vector.broadcast %94 : vector<1x128xf32> to vector<2x128xf32>
    %98 = arith.addf %96, %97 : vector<2x128xf32>
    %c0_37 = arith.constant 0 : index
    %c0_38 = arith.constant 0 : index
    %99 = vector.load %arg6[%c0_37, %c0_38] : memref<2x128xf32, #tpu.memory_space<vmem>>, vector<2x128xf32>
    tpu.vector_store %arg6[%c0_37, %c0_38], %98 {strides = array<i32>} : memref<2x128xf32, #tpu.memory_space<vmem>>, vector<2x128xf32>,
    return
  }
}

</mosaic_0001>

<llo_original>
// kernel: tpu_custom_call.1
$region0: #{tpu_custom_call.1}
  #allocation0 [shape = 'u32[]', space=smem, size = 0x4, offset = 0x4, fixed_abs, tag = 'smem constant byte address 0x4 - core index']
  #allocation1 [shape = 'u32[72,128]{1,0:T(1,128)}', space=vmem, size = 0x9000, scoped, tag = 'internal scratch']
  %s0 = inlined_call_operand.vmem [shape: bf16[32,4], index: 0, kind: input, shape index: {}]
  %s1 = inlined_call_operand.vmem [shape: bf16[4,128], index: 1, kind: input, shape index: {}]
  %s2 = inlined_call_operand.hbm [shape: bf16[128,128], index: 2, kind: input, shape index: {}]
  %s3 = inlined_call_operand.hbm [shape: bf16[128,128], index: 3, kind: input, shape index: {}]
  %s4 = inlined_call_operand.hbm [shape: bf16[128,128], index: 4, kind: input, shape index: {}]
  %s5 = inlined_call_operand.vmem [shape: f32[8,128], index: 5, kind: input, shape index: {}]
  %s6 = inlined_call_operand.hbm [shape: f32[2,128], index: 6, kind: output, shape index: {}]
  %s7 = sld [smem:[#allocation0]]
  $region46: #{tpu_custom_call.1} parent=0
    _
  %s9 = ssub.s32 1, %s7
  %s10 = scalar_select 0, %s9, %s7
  $region1: #{tpu_custom_call.1} parent=0
    #allocation2 [shape = 'u8[32768]{0}', space=vmem, size = 0x8000, scoped, tag = 'input window, operand 2, single buffered']
    #allocation3 [shape = 's32[1]{0}', space=sflag, size = 0x4, scoped, tag = 'scoped memory for tpu_custom_call.1']
    #allocation4 [shape = 's32[1]{0}', space=sflag, size = 0x4, scoped, tag = 'scoped memory for tpu_custom_call.1']
    #allocation5 [shape = 'u8[32768]{0}', space=vmem, size = 0x8000, scoped, tag = 'input window, operand 3, single buffered']
    #allocation6 [shape = 's32[1]{0}', space=sflag, size = 0x4, scoped, tag = 'scoped memory for tpu_custom_call.1']
    #allocation7 [shape = 'u8[32768]{0}', space=vmem, size = 0x8000, scoped, tag = 'input window, operand 4, single buffered']
    #allocation8 [shape = 'u8[1024]{0}', space=vmem, size = 0x400, scoped, tag = 'output window, operand 0, single buffered']
    %11 = vsyncpa [#allocation3], 0
    %12 = vsyncpa [#allocation6], 0
    %13 = vsyncpa [#allocation4], 0
    // Predicated region
    $region2: #{tpu_custom_call.1} parent=1 // pred_check
      _
    $region3: #{tpu_custom_call.1} parent=1 // pred_check_branch
      %15 = sbr.rel (0) target = $region5
    $region4: #{tpu_custom_call.1} parent=1 // pred_region
      _
    $region5: #{tpu_custom_call.1} parent=1 // pred_fallthru
      _
    // Predicated region
    $region6: #{tpu_custom_call.1} parent=1 // pred_check
      _
    $region7: #{tpu_custom_call.1} parent=1 // pred_check_branch
      %17 = sbr.rel (0) target = $region9
    $region8: #{tpu_custom_call.1} parent=1 // pred_region
      _
    $region9: #{tpu_custom_call.1} parent=1 // pred_fallthru
      _
    // Predicated region
    $region10: #{tpu_custom_call.1} parent=1 // pred_check
      _
    $region11: #{tpu_custom_call.1} parent=1 // pred_check_branch
      %19 = sbr.rel (0) target = $region13
    $region12: #{tpu_custom_call.1} parent=1 // pred_region
      %21 = vsyncadd [#allocation3], 0
      %s22 = sshll.u32 %s2, 4
      %s23 = int_to_ptr.hbm [resolvable:$true] %s22
      %s24 = sshll.u32 [#allocation2], 4
      %s25 = int_to_ptr.vmem [resolvable:$true] %s24
      %30 = dma.hbm_to_vmem [thread:$0]  %s23, 1024, %s25, [#allocation3], 64, 64, 4
    $region13: #{tpu_custom_call.1} parent=1 // pred_fallthru
      _
    // Predicated region
    $region14: #{tpu_custom_call.1} parent=1 // pred_check
      _
    $region15: #{tpu_custom_call.1} parent=1 // pred_check_branch
      %32 = sbr.rel (0) target = $region17
    $region16: #{tpu_custom_call.1} parent=1 // pred_region
      %34 = vsyncadd [#allocation6], 0
      %s35 = sshll.u32 %s3, 4
      %s36 = int_to_ptr.hbm [resolvable:$true] %s35
      %s37 = sshll.u32 [#allocation5], 4
      %s38 = int_to_ptr.vmem [resolvable:$true] %s37
      %43 = dma.hbm_to_vmem [thread:$0]  %s36, 1024, %s38, [#allocation6], 64, 64, 4
    $region17: #{tpu_custom_call.1} parent=1 // pred_fallthru
      _
    // Predicated region
    $region18: #{tpu_custom_call.1} parent=1 // pred_check
      _
    $region19: #{tpu_custom_call.1} parent=1 // pred_check_branch
      %45 = sbr.rel (0) target = $region21
    $region20: #{tpu_custom_call.1} parent=1 // pred_region
      %47 = vsyncadd [#allocation6], 0
      %s48 = sshll.u32 %s4, 4
      %s49 = int_to_ptr.hbm [resolvable:$true] %s48
      %s50 = sshll.u32 [#allocation7], 4
      %s51 = int_to_ptr.vmem [resolvable:$true] %s50
      %56 = dma.hbm_to_vmem [thread:$0]  %s49, 1024, %s51, [#allocation6], 64, 64, 4
    $region21: #{tpu_custom_call.1} parent=1 // pred_fallthru
      _
    // Predicated region
    $region22: #{tpu_custom_call.1} parent=1 // pred_check
      _
    $region23: #{tpu_custom_call.1} parent=1 // pred_check_branch
      %58 = sbr.rel (0) target = $region25
    $region24: #{tpu_custom_call.1} parent=1 // pred_region
      _
    $region25: #{tpu_custom_call.1} parent=1 // pred_fallthru
      _
    // Predicated region
    $region26: #{tpu_custom_call.1} parent=1 // pred_check
      _
    $region27: #{tpu_custom_call.1} parent=1 // pred_check_branch
      %60 = sbr.rel (0) target = $region29
    $region28: #{tpu_custom_call.1} parent=1 // pred_region
      %62 = dma.done [#allocation3], 1024
    $region29: #{tpu_custom_call.1} parent=1 // pred_fallthru
      _
    // Predicated region
    $region30: #{tpu_custom_call.1} parent=1 // pred_check
      _
    $region31: #{tpu_custom_call.1} parent=1 // pred_check_branch
      %64 = sbr.rel (0) target = $region33
    $region32: #{tpu_custom_call.1} parent=1 // pred_region
      %66 = dma.done [#allocation6], 1024
    $region33: #{tpu_custom_call.1} parent=1 // pred_fallthru
      _
    // Predicated region
    $region34: #{tpu_custom_call.1} parent=1 // pred_check
      _
    $region35: #{tpu_custom_call.1} parent=1 // pred_check_branch
      %68 = sbr.rel (0) target = $region37
    $region36: #{tpu_custom_call.1} parent=1 // pred_region
      %70 = dma.done [#allocation6], 1024
    $region37: #{tpu_custom_call.1} parent=1 // pred_fallthru
      _
    %v72 = vld [vmem:[%s5] sm:$0xff]
    %v73 = vld [vmem:[%s0] sm:$0xf]
    %v74 = vld [vmem:[%s0 + $0x4] sm:$0xf]
    %v75 = vld [vmem:[%s0 + $0x8] sm:$0xf]
    %v76 = vld [vmem:[%s0 + $0xc] sm:$0xf]
    %v77 = vld [vmem:[%s1] sm:$0x3]
    %v82 = vunpack.c.l.b16 %v73
    %v83 = vunpack.c.l.b16 %v74
    %v84 = vunpack.c.l.b16 %v75
    %v85 = vunpack.c.l.b16 %v76
    %v86 = vpack.c.b16 %v83, %v82
    %v87 = vpack.c.b16 %v85, %v84
    %vm88 = vcmask 31744
    %v90 = vsel %vm88, %v86, 0
    %v93 = vsel %vm88, %v87, 0
    %vm95 = vcmask 1041408
    %v97 = vsel %vm95, %v77, 0
    %99 = vmatpush.bf16.msra.mxu0 0
    %100 = vmatpush.bf16.msra.mxu0 0
    %101 = vmatpush.bf16.msra.mxu0 0
    %102 = vmatpush.bf16.msra.mxu0 0
    %103 = vmatpush.bf16.msra.mxu0 0
    %104 = vmatpush.bf16.msra.mxu0 0
    %105 = vmatpush.bf16.msra.mxu0 0
    %106 = vmatpush.bf16.msra.mxu0 %v97
    %107 = vmatmul.bf16.gmra.mxu0 %v90
    %v108 = vpop.f32.mrf.mxu0
    %v109 = vadd.f32 0.0, %v108
    %v110 = vpop.f32.mrf.mxu0
    %v111 = vadd.f32 0.0, %v110
    %112 = vmatmul.bf16.gmra.mxu0 %v93
    %v113 = vpop.f32.mrf.mxu0
    %v114 = vadd.f32 0.0, %v113
    %v115 = vpop.f32.mrf.mxu0
    %v116 = vadd.f32 0.0, %v115
    %117 = vdwg.mxu0
    %vm118 = vcmask 261120
    %v120 = vsel %vm118, 1.0, 0
    %122 = vmatpush.msra.mxu0 0.0
    %123 = vmatpush.msra.mxu0 0.0
    %124 = vmatpush.msra.mxu0 0.0
    %125 = vmatpush.msra.mxu0 0.0
    %126 = vmatpush.msra.mxu0 0.0
    %127 = vmatpush.msra.mxu0 0.0
    %128 = vmatpush.msra.mxu0 0.0
    %129 = vmatpush.msra.mxu0 0.0
    %130 = vmatpush.msra.mxu0 0.0
    %131 = vmatpush.msra.mxu0 0.0
    %132 = vmatpush.msra.mxu0 0.0
    %133 = vmatpush.msra.mxu0 0.0
    %134 = vmatpush.msra.mxu0 %v116
    %135 = vmatpush.msra.mxu0 %v114
    %136 = vmatpush.msra.mxu0 %v111
    %137 = vmatpush.msra.mxu0 %v109
    %138 = vmatmul.f32.gmra.mxu0 %v120
    %v139 = vpop.f32.mrf.mxu0
    %v140 = vadd.f32 0.0, %v139
    %141 = vdwg.mxu0
    %v142 = vmul.f32 %v109, %v109
    %v143 = vmul.f32 %v111, %v111
    %v144 = vmul.f32 %v114, %v114
    %v145 = vmul.f32 %v116, %v116
    %146 = vmatpush.msra.mxu0 0.0
    %147 = vmatpush.msra.mxu0 0.0
    %148 = vmatpush.msra.mxu0 0.0
    %149 = vmatpush.msra.mxu0 0.0
    %150 = vmatpush.msra.mxu0 0.0
    %151 = vmatpush.msra.mxu0 0.0
    %152 = vmatpush.msra.mxu0 0.0
    %153 = vmatpush.msra.mxu0 0.0
    %154 = vmatpush.msra.mxu0 0.0
    %155 = vmatpush.msra.mxu0 0.0
    %156 = vmatpush.msra.mxu0 0.0
    %157 = vmatpush.msra.mxu0 0.0
    %158 = vmatpush.msra.mxu0 %v145
    %159 = vmatpush.msra.mxu0 %v144
    %160 = vmatpush.msra.mxu0 %v143
    %161 = vmatpush.msra.mxu0 %v142
    %162 = vmatmul.f32.gmra.mxu0 %v120
    %v163 = vpop.f32.mrf.mxu0
    %v164 = vadd.f32 0.0, %v163
    %165 = vdwg.mxu0
    %v166 = vmul.f32 %v140, 0.03125
    %v167 = vmul.f32 %v164, 0.03125
    %v168 = vmul.f32 %v166, %v166
    %v169 = vsub.f32 %v167, %v168
    %v170 = vmax.f32 %v169, 0.0
    %v171 = vadd.f32 %v170, 1e-05
    %v172 = vrsqrt.pop %v171
    %v173 = vmul.f32 %v172, %v171
    %v174 = vmul.f32 %v173, %v172
    %v175 = vmul.f32 0.5, %v174
    %v176 = vsub.f32 1.5, %v175
    %v177 = vmul.f32 %v172, %v176
    %vm178 = vweird.f32 %v171
    %vm179 = vweird.f32 %v172
    %vm180 = vmor %vm178, %vm179
    %v181 = vsel %vm180, %v172, %v177
    %v182 = vmul.f32 %v72, %v181
    %v183 = vmul.f32 %v166, %v182
    %v185 = vrot.slane %v183, 7
    %v187 = vsub.f32 %v72, %v185
    %v188 = vperm.slane %v182, 0
    %v189 = vmul.f32 %v109, %v188
    %v190 = vmul.f32 %v111, %v188
    %v191 = vmul.f32 %v114, %v188
    %v192 = vmul.f32 %v116, %v188
    %v193 = vperm.slane %v187, 1
    %v194 = vadd.f32 %v189, %v193
    %v195 = vadd.f32 %v190, %v193
    %v196 = vadd.f32 %v191, %v193
    %v197 = vadd.f32 %v192, %v193
    %v198 = vmax.f32 %v194, 0.0
    %v199 = vmax.f32 %v195, 0.0
    %v200 = vmax.f32 %v196, 0.0
    %v201 = vmax.f32 %v197, 0.0
    %v202 = vpack.c.bf16 %v199, %v198
    %v203 = vpack.c.bf16 %v201, %v200
    %v204 = vld [vmem:[#allocation2] sm:$0xf]
    %v205 = vld [vmem:[#allocation2 + $0x4] sm:$0xf]
    %v206 = vld [vmem:[#allocation2 + $0x8] sm:$0xf]
    %v207 = vld [vmem:[#allocation2 + $0xc] sm:$0xf]
    %v208 = vld [vmem:[#allocation2 + $0x10] sm:$0xf]
    %v209 = vld [vmem:[#allocation2 + $0x14] sm:$0xf]
    %v210 = vld [vmem:[#allocation2 + $0x18] sm:$0xf]
    %v211 = vld [vmem:[#allocation2 + $0x1c] sm:$0xf]
    %v212 = vld [vmem:[#allocation2 + $0x20] sm:$0xf]
    %v213 = vld [vmem:[#allocation2 + $0x24] sm:$0xf]
    %v214 = vld [vmem:[#allocation2 + $0x28] sm:$0xf]
    %v215 = vld [vmem:[#allocation2 + $0x2c] sm:$0xf]
    %v216 = vld [vmem:[#allocation2 + $0x30] sm:$0xf]
    %v217 = vld [vmem:[#allocation2 + $0x34] sm:$0xf]
    %v218 = vld [vmem:[#allocation2 + $0x38] sm:$0xf]
    %v219 = vld [vmem:[#allocation2 + $0x3c] sm:$0xf]
    %v236 = vunpack.c.l.b16 %v204
    %v237 = vunpack.c.l.b16 %v205
    %v238 = vunpack.c.l.b16 %v206
    %v239 = vunpack.c.l.b16 %v207
    %v240 = vunpack.c.l.b16 %v208
    %v241 = vunpack.c.l.b16 %v209
    %v242 = vunpack.c.l.b16 %v210
    %v243 = vunpack.c.l.b16 %v211
    %v244 = vunpack.c.l.b16 %v212
    %v245 = vunpack.c.l.b16 %v213
    %v246 = vunpack.c.l.b16 %v214
    %v247 = vunpack.c.l.b16 %v215
    %v248 = vunpack.c.l.b16 %v216
    %v249 = vunpack.c.l.b16 %v217
    %v250 = vunpack.c.l.b16 %v218
    %v251 = vunpack.c.l.b16 %v219
    %v252 = vpack.c.b16 %v237, %v236
    %v253 = vpack.c.b16 %v239, %v238
    %v254 = vpack.c.b16 %v241, %v240
    %v255 = vpack.c.b16 %v243, %v242
    %v256 = vpack.c.b16 %v245, %v244
    %v257 = vpack.c.b16 %v247, %v246
    %v258 = vpack.c.b16 %v249, %v248
    %v259 = vpack.c.b16 %v251, %v250
    %268 = vmatpush.bf16.msra.mxu0 %v259
    %269 = vmatpush.bf16.msra.mxu0 %v258
    %270 = vmatpush.bf16.msra.mxu0 %v257
    %271 = vmatpush.bf16.msra.mxu0 %v256
    %272 = vmatpush.bf16.msra.mxu0 %v255
    %273 = vmatpush.bf16.msra.mxu0 %v254
    %274 = vmatpush.bf16.msra.mxu0 %v253
    %275 = vmatpush.bf16.msra.mxu0 %v252
    %276 = vmatmul.bf16.gmra.mxu0 %v202
    %v277 = vpop.f32.mrf.mxu0
    %v278 = vadd.f32 0.0, %v277
    %v279 = vpop.f32.mrf.mxu0
    %v280 = vadd.f32 0.0, %v279
    %281 = vmatmul.bf16.gmra.mxu0 %v203
    %v282 = vpop.f32.mrf.mxu0
    %v283 = vadd.f32 0.0, %v282
    %v284 = vpop.f32.mrf.mxu0
    %v285 = vadd.f32 0.0, %v284
    %286 = vdwg.mxu0
    %287 = vmatpush.msra.mxu0 0.0
    %288 = vmatpush.msra.mxu0 0.0
    %289 = vmatpush.msra.mxu0 0.0
    %290 = vmatpush.msra.mxu0 0.0
    %291 = vmatpush.msra.mxu0 0.0
    %292 = vmatpush.msra.mxu0 0.0
    %293 = vmatpush.msra.mxu0 0.0
    %294 = vmatpush.msra.mxu0 0.0
    %295 = vmatpush.msra.mxu0 0.0
    %296 = vmatpush.msra.mxu0 0.0
    %297 = vmatpush.msra.mxu0 0.0
    %298 = vmatpush.msra.mxu0 0.0
    %299 = vmatpush.msra.mxu0 %v285
    %300 = vmatpush.msra.mxu0 %v283
    %301 = vmatpush.msra.mxu0 %v280
    %302 = vmatpush.msra.mxu0 %v278
    %303 = vmatmul.f32.gmra.mxu0 %v120
    %v304 = vpop.f32.mrf.mxu0
    %v305 = vadd.f32 0.0, %v304
    %306 = vdwg.mxu0
    %v307 = vmul.f32 %v278, %v278
    %v308 = vmul.f32 %v280, %v280
    %v309 = vmul.f32 %v283, %v283
    %v310 = vmul.f32 %v285, %v285
    %311 = vmatpush.msra.mxu0 0.0
    %312 = vmatpush.msra.mxu0 0.0
    %313 = vmatpush.msra.mxu0 0.0
    %314 = vmatpush.msra.mxu0 0.0
    %315 = vmatpush.msra.mxu0 0.0
    %316 = vmatpush.msra.mxu0 0.0
    %317 = vmatpush.msra.mxu0 0.0
    %318 = vmatpush.msra.mxu0 0.0
    %319 = vmatpush.msra.mxu0 0.0
    %320 = vmatpush.msra.mxu0 0.0
    %321 = vmatpush.msra.mxu0 0.0
    %322 = vmatpush.msra.mxu0 0.0
    %323 = vmatpush.msra.mxu0 %v310
    %324 = vmatpush.msra.mxu0 %v309
    %325 = vmatpush.msra.mxu0 %v308
    %326 = vmatpush.msra.mxu0 %v307
    %327 = vmatmul.f32.gmra.mxu0 %v120
    %v328 = vpop.f32.mrf.mxu0
    %v329 = vadd.f32 0.0, %v328
    %330 = vdwg.mxu0
    %v331 = vmul.f32 %v305, 0.03125
    %v332 = vmul.f32 %v329, 0.03125
    %v333 = vmul.f32 %v331, %v331
    %v334 = vsub.f32 %v332, %v333
    %v335 = vmax.f32 %v334, 0.0
    %v336 = vadd.f32 %v335, 1e-05
    %v337 = vrsqrt.pop %v336
    %v338 = vmul.f32 %v337, %v336
    %v339 = vmul.f32 %v338, %v337
    %v340 = vmul.f32 0.5, %v339
    %v341 = vsub.f32 1.5, %v340
    %v342 = vmul.f32 %v337, %v341
    %vm343 = vweird.f32 %v336
    %vm344 = vweird.f32 %v337
    %vm345 = vmor %vm343, %vm344
    %v346 = vsel %vm345, %v337, %v342
    %v348 = vrot.slane %v346, 6
    %v350 = vmul.f32 %v72, %v348
    %v352 = vrot.slane %v350, 2
    %v354 = vmul.f32 %v331, %v352
    %v356 = vrot.slane %v354, 5
    %v358 = vsub.f32 %v72, %v356
    %v359 = vperm.slane %v350, 2
    %v360 = vmul.f32 %v278, %v359
    %v361 = vmul.f32 %v280, %v359
    %v362 = vmul.f32 %v283, %v359
    %v363 = vmul.f32 %v285, %v359
    %v364 = vperm.slane %v358, 3
    %v365 = vadd.f32 %v360, %v364
    %v366 = vadd.f32 %v361, %v364
    %v367 = vadd.f32 %v362, %v364
    %v368 = vadd.f32 %v363, %v364
    %v369 = vmax.f32 %v365, 0.0
    %v370 = vmax.f32 %v366, 0.0
    %v371 = vmax.f32 %v367, 0.0
    %v372 = vmax.f32 %v368, 0.0
    %v373 = vpack.c.bf16 %v369, %v369
    %v374 = vpack.c.bf16 %v370, %v370
    %v375 = vpack.c.bf16 %v371, %v371
    %v376 = vpack.c.bf16 %v372, %v372
    %v377 = vunpack.c.l.bf16 %v373
    %v378 = vunpack.c.l.bf16 %v374
    %v379 = vunpack.c.l.bf16 %v375
    %v380 = vunpack.c.l.bf16 %v376
    %v381 = vmax.f32 %v377, %v378
    %v382 = vrot.slane %v381, 4
    %v383 = vmax.f32 %v381, %v382
    %v384 = vrot.slane %v383, 2
    %v385 = vmax.f32 %v383, %v384
    %v386 = vrot.slane %v385, 1
    %v387 = vmax.f32 %v385, %v386
    %v388 = vmax.f32 %v379, %v380
    %v389 = vrot.slane %v388, 4
    %v390 = vmax.f32 %v388, %v389
    %v391 = vrot.slane %v390, 2
    %v392 = vmax.f32 %v390, %v391
    %v393 = vrot.slane %v392, 1
    %v394 = vmax.f32 %v392, %v393
    %v395 = vpack.c.bf16 %v387, %v387
    %v396 = vpack.c.bf16 %v394, %v394
    %v397 = vld [vmem:[#allocation5] sm:$0xf]
    %v398 = vld [vmem:[#allocation5 + $0x4] sm:$0xf]
    %v399 = vld [vmem:[#allocation5 + $0x8] sm:$0xf]
    %v400 = vld [vmem:[#allocation5 + $0xc] sm:$0xf]
    %v401 = vld [vmem:[#allocation5 + $0x10] sm:$0xf]
    %v402 = vld [vmem:[#allocation5 + $0x14] sm:$0xf]
    %v403 = vld [vmem:[#allocation5 + $0x18] sm:$0xf]
    %v404 = vld [vmem:[#allocation5 + $0x1c] sm:$0xf]
    %v405 = vld [vmem:[#allocation5 + $0x20] sm:$0xf]
    %v406 = vld [vmem:[#allocation5 + $0x24] sm:$0xf]
    %v407 = vld [vmem:[#allocation5 + $0x28] sm:$0xf]
    %v408 = vld [vmem:[#allocation5 + $0x2c] sm:$0xf]
    %v409 = vld [vmem:[#allocation5 + $0x30] sm:$0xf]
    %v410 = vld [vmem:[#allocation5 + $0x34] sm:$0xf]
    %v411 = vld [vmem:[#allocation5 + $0x38] sm:$0xf]
    %v412 = vld [vmem:[#allocation5 + $0x3c] sm:$0xf]
    %v415 = vunpack.c.l.b16 %v395
    %v416 = vunpack.c.l.b16 %v396
    %vm417 = vcmask 1041409
    %v418 = vsel %vm417, %v416, %v415
    %v419 = vpack.c.b16 %v418, %v418
    %v437 = vunpack.c.l.b16 %v397
    %v438 = vunpack.c.l.b16 %v398
    %v439 = vunpack.c.l.b16 %v399
    %v440 = vunpack.c.l.b16 %v400
    %v441 = vunpack.c.l.b16 %v401
    %v442 = vunpack.c.l.b16 %v402
    %v443 = vunpack.c.l.b16 %v403
    %v444 = vunpack.c.l.b16 %v404
    %v445 = vunpack.c.l.b16 %v405
    %v446 = vunpack.c.l.b16 %v406
    %v447 = vunpack.c.l.b16 %v407
    %v448 = vunpack.c.l.b16 %v408
    %v449 = vunpack.c.l.b16 %v409
    %v450 = vunpack.c.l.b16 %v410
    %v451 = vunpack.c.l.b16 %v411
    %v452 = vunpack.c.l.b16 %v412
    %v453 = vpack.c.b16 %v438, %v437
    %v454 = vpack.c.b16 %v440, %v439
    %v455 = vpack.c.b16 %v442, %v441
    %v456 = vpack.c.b16 %v444, %v443
    %v457 = vpack.c.b16 %v446, %v445
    %v458 = vpack.c.b16 %v448, %v447
    %v459 = vpack.c.b16 %v450, %v449
    %v460 = vpack.c.b16 %v452, %v451
    %469 = vmatpush.bf16.msra.mxu0 %v460
    %470 = vmatpush.bf16.msra.mxu0 %v459
    %471 = vmatpush.bf16.msra.mxu0 %v458
    %472 = vmatpush.bf16.msra.mxu0 %v457
    %473 = vmatpush.bf16.msra.mxu0 %v456
    %474 = vmatpush.bf16.msra.mxu0 %v455
    %475 = vmatpush.bf16.msra.mxu0 %v454
    %476 = vmatpush.bf16.msra.mxu0 %v453
    %477 = vmatmul.bf16.gmra.mxu0 %v419
    %v478 = vpop.f32.mrf.mxu0
    %v479 = vadd.f32 0.0, %v478
    %v480 = vpop.f32.mrf.mxu0
    %481 = vdwg.mxu0
    %v482 = vsel %vm95, %v479, 0.0
    %v483 = vrot.slane %v482, 4
    %v484 = vadd.f32 %v482, %v483
    %v485 = vrot.slane %v484, 2
    %v486 = vadd.f32 %v484, %v485
    %v487 = vrot.slane %v486, 1
    %v488 = vadd.f32 %v486, %v487
    %v489 = vmul.f32 %v479, %v479
    %v490 = vsel %vm95, %v489, 0.0
    %v491 = vrot.slane %v490, 4
    %v492 = vadd.f32 %v490, %v491
    %v493 = vrot.slane %v492, 2
    %v494 = vadd.f32 %v492, %v493
    %v495 = vrot.slane %v494, 1
    %v496 = vadd.f32 %v494, %v495
    %v497 = vmul.f32 %v488, 0.5
    %v498 = vmul.f32 %v496, 0.5
    %v499 = vmul.f32 %v497, %v497
    %v500 = vsub.f32 %v498, %v499
    %v501 = vmax.f32 %v500, 0.0
    %v502 = vadd.f32 %v501, 1e-05
    %v503 = vrsqrt.pop %v502
    %v504 = vmul.f32 %v503, %v502
    %v505 = vmul.f32 %v504, %v503
    %v506 = vmul.f32 0.5, %v505
    %v507 = vsub.f32 1.5, %v506
    %v508 = vmul.f32 %v503, %v507
    %vm509 = vweird.f32 %v502
    %vm510 = vweird.f32 %v503
    %vm511 = vmor %vm509, %vm510
    %v512 = vsel %vm511, %v503, %v508
    %v513 = vmul.f32 %v72, %v512
    %v514 = vmul.f32 %v497, %v513
    %v516 = vrot.slane %v514, 7
    %v518 = vsub.f32 %v72, %v516
    %v519 = vperm.slane %v513, 4
    %v520 = vmul.f32 %v479, %v519
    %v521 = vperm.slane %v518, 5
    %v522 = vadd.f32 %v520, %v521
    %v523 = vmax.f32 %v522, 0.0
    %v524 = vpack.c.bf16 %v523, %v523
    %v525 = vld [vmem:[#allocation7] sm:$0xf]
    %v526 = vld [vmem:[#allocation7 + $0x4] sm:$0xf]
    %v527 = vld [vmem:[#allocation7 + $0x8] sm:$0xf]
    %v528 = vld [vmem:[#allocation7 + $0xc] sm:$0xf]
    %v529 = vld [vmem:[#allocation7 + $0x10] sm:$0xf]
    %v530 = vld [vmem:[#allocation7 + $0x14] sm:$0xf]
    %v531 = vld [vmem:[#allocation7 + $0x18] sm:$0xf]
    %v532 = vld [vmem:[#allocation7 + $0x1c] sm:$0xf]
    %v533 = vld [vmem:[#allocation7 + $0x20] sm:$0xf]
    %v534 = vld [vmem:[#allocation7 + $0x24] sm:$0xf]
    %v535 = vld [vmem:[#allocation7 + $0x28] sm:$0xf]
    %v536 = vld [vmem:[#allocation7 + $0x2c] sm:$0xf]
    %v537 = vld [vmem:[#allocation7 + $0x30] sm:$0xf]
    %v538 = vld [vmem:[#allocation7 + $0x34] sm:$0xf]
    %v539 = vld [vmem:[#allocation7 + $0x38] sm:$0xf]
    %v540 = vld [vmem:[#allocation7 + $0x3c] sm:$0xf]
    %v541 = vperm.slane %v72, 6
    %v558 = vunpack.c.l.b16 %v525
    %v559 = vunpack.c.l.b16 %v526
    %v560 = vunpack.c.l.b16 %v527
    %v561 = vunpack.c.l.b16 %v528
    %v562 = vunpack.c.l.b16 %v529
    %v563 = vunpack.c.l.b16 %v530
    %v564 = vunpack.c.l.b16 %v531
    %v565 = vunpack.c.l.b16 %v532
    %v566 = vunpack.c.l.b16 %v533
    %v567 = vunpack.c.l.b16 %v534
    %v568 = vunpack.c.l.b16 %v535
    %v569 = vunpack.c.l.b16 %v536
    %v570 = vunpack.c.l.b16 %v537
    %v571 = vunpack.c.l.b16 %v538
    %v572 = vunpack.c.l.b16 %v539
    %v573 = vunpack.c.l.b16 %v540
    %v574 = vpack.c.b16 %v559, %v558
    %v575 = vpack.c.b16 %v561, %v560
    %v576 = vpack.c.b16 %v563, %v562
    %v577 = vpack.c.b16 %v565, %v564
    %v578 = vpack.c.b16 %v567, %v566
    %v579 = vpack.c.b16 %v569, %v568
    %v580 = vpack.c.b16 %v571, %v570
    %v581 = vpack.c.b16 %v573, %v572
    %590 = vmatpush.bf16.msra.mxu0 %v581
    %591 = vmatpush.bf16.msra.mxu0 %v580
    %592 = vmatpush.bf16.msra.mxu0 %v579
    %593 = vmatpush.bf16.msra.mxu0 %v578
    %594 = vmatpush.bf16.msra.mxu0 %v577
    %595 = vmatpush.bf16.msra.mxu0 %v576
    %596 = vmatpush.bf16.msra.mxu0 %v575
    %597 = vmatpush.bf16.msra.mxu0 %v574
    %598 = vmatmul.bf16.gmra.mxu0 %v524
    %v599 = vpop.f32.mrf.mxu0
    %v600 = vadd.f32 %v541, %v599
    %v601 = vpop.f32.mrf.mxu0
    %602 = vdwg.mxu0
    %v603 = vperm.slane %v72, 7
    %v604 = vadd.f32 %v600, %v603
    %605 = vst [vmem:[#allocation8] sm:$0x3] %v604
    // Predicated region
    $region38: #{tpu_custom_call.1} parent=1 // pred_check
      _
    $region39: #{tpu_custom_call.1} parent=1 // pred_check_branch
      %607 = sbr.rel (0) target = $region41
    $region40: #{tpu_custom_call.1} parent=1 // pred_region
      %609 = vsyncadd [#allocation4], 0
      %s611 = sshll.u32 [#allocation8], 4
      %s612 = int_to_ptr.vmem [resolvable:$true] %s611
      %s613 = sshll.u32 %s6, 4
      %s614 = int_to_ptr.hbm [resolvable:$true] %s613
      %616 = dma.vmem_to_hbm [thread:$0]  %s612, 32, %s614, [#allocation4]
    $region41: #{tpu_custom_call.1} parent=1 // pred_fallthru
      _
    // Predicated region
    $region42: #{tpu_custom_call.1} parent=1 // pred_check
      _
    $region43: #{tpu_custom_call.1} parent=1 // pred_check_branch
      %618 = sbr.rel (0) target = $region45
    $region44: #{tpu_custom_call.1} parent=1 // pred_region
      %620 = dma.done [#allocation4], 32
    $region45: #{tpu_custom_call.1} parent=1 // pred_fallthru
      _
    %621 = vsyncpa [#allocation3], 1
    %622 = vsyncpa [#allocation6], 1
    %623 = vsyncpa [#allocation4], 1

</llo_original>
